<compile_context>
chip_gen: v5e
topology: v5e:2x2
jax: 0.10.0
libtpu: 0.0.40
codegen_flags: <defaults>
</compile_context>

<pallas_src>
import math

import jax
import jax.numpy as jnp
from jax import lax
from jax.experimental import pallas as pl
from jax.experimental.pallas import tpu as pltpu


def make_mhsa_kernel(num_heads: int, d_k: int, d_model: int, d_pad: int,
                     compute_dtype, approx_reciprocal: bool):
    """Build the per-batch MHSA kernel body."""

    def kernel(x_ref, wqkv_ref, bqkv_ref, wo_ref, bo_ref, o_ref, ctx_ref):
        # x_ref: (S, d_pad) in compute_dtype (batch dim squeezed by BlockSpec).
        x = x_ref[...]

        # ---- Fused Q/K/V projection: one wide MXU matmul, N = 3 * d_pad. ----
        qkv = jnp.dot(x, wqkv_ref[...],
                      preferred_element_type=jnp.float32) + bqkv_ref[...]
        qkv = qkv.astype(compute_dtype)                  # (S, 3*d_pad)
        q = qkv[:, 0 * d_pad:1 * d_pad]                  # scale already folded into wq
        k = qkv[:, 1 * d_pad:2 * d_pad]
        v = qkv[:, 2 * d_pad:3 * d_pad]

        # Zero the context scratch only if there are padded lanes (wo's padded rows are
        # zero, but 0 * uninitialized could still produce NaN).
        if d_pad != d_model:
            ctx_ref[...] = jnp.zeros_like(ctx_ref)

        # ---- Per-head attention: plain 2-D matmuls on lane slices (no XLU relayout). --
        for h in range(num_heads):
            lo = h * d_k
            hi = lo + d_k
            q_h = q[:, lo:hi]                            # (S, d_k)
            k_h = k[:, lo:hi]                            # (S, d_k)
            v_h = v[:, lo:hi]                            # (S, d_k)

            # scores = (q_h / sqrt(d_k)) @ k_h.T  -- scale pre-folded into wq/bq.
            s = lax.dot_general(q_h, k_h, (((1,), (1,)), ((), ())),
                                preferred_element_type=jnp.float32)  # (S, S)

            # Softmax over keys (f32).
            m = jnp.max(s, axis=-1, keepdims=True)
            p = jnp.exp(s - m)
            denom = jnp.sum(p, axis=-1, keepdims=True)
            attn = p * pl.reciprocal(denom, approx=approx_reciprocal)

            # context_h = attn @ v_h, written straight into the head's lane slice.
            ctx_h = jnp.dot(attn.astype(compute_dtype), v_h,
                            preferred_element_type=jnp.float32)      # (S, d_k)
            ctx_ref[:, lo:hi] = ctx_h.astype(ctx_ref.dtype)

        # ---- Output projection. ----
        out = jnp.dot(ctx_ref[...], wo_ref[...],
                      preferred_element_type=jnp.float32) + bo_ref[...]
        o_ref[...] = out.astype(o_ref.dtype)

    return kernel


def multi_headed_self_attention(x, params, num_heads, *,
                                compute_dtype=jnp.bfloat16,
                                approx_reciprocal=True):
    """x: (B, S, D) float32.  params: PyTorch-convention weights (D, D) and biases (D,).

    compute_dtype=bf16 + approx_reciprocal=True is the fast path (MXU bf16, EUP vrcp);
    compute_dtype=f32 + approx_reciprocal=False reproduces the reference to ~1e-4.
    """
    B, S, D = x.shape
    assert D % num_heads == 0
    d_k = D // num_heads
    scale = 1.0 / math.sqrt(d_k)

    # Lane-dense padding of d_model up to a multiple of 128 (exact: pads are zero).
    d_pad = ((D + 127) // 128) * 128
    pad = d_pad - D

    def prep_w(w, s=1.0):
        # torch Linear computes x @ W.T + b -> pre-transpose so kernel does x @ W + b.
        wt = (w.T * s).astype(jnp.float32)
        if pad:
            wt = jnp.pad(wt, ((0, pad), (0, pad)))
        return wt.astype(compute_dtype)

    def prep_b(b, s=1.0):
        bb = (b * s).astype(jnp.float32).reshape(1, D)
        if pad:
            bb = jnp.pad(bb, ((0, 0), (0, pad)))
        return bb                                        # biases stay f32 (tiny)

    # Fold the 1/sqrt(d_k) softmax scale into the query projection.
    wq = prep_w(params["wq"], scale)
    wk = prep_w(params["wk"])
    wv = prep_w(params["wv"])
    wo = prep_w(params["wo"])
    bq = prep_b(params["bq"], scale)
    bk = prep_b(params["bk"])
    bv = prep_b(params["bv"])
    bo = prep_b(params["bo"])

    # Fused QKV weight / bias.
    wqkv = jnp.concatenate([wq, wk, wv], axis=1)         # (d_pad, 3*d_pad)
    bqkv = jnp.concatenate([bq, bk, bv], axis=1)         # (1, 3*d_pad) f32

    xp = x.astype(compute_dtype)
    if pad:
        xp = jnp.pad(xp, ((0, 0), (0, 0), (0, pad)))     # (B, S, d_pad)

    kernel = make_mhsa_kernel(num_heads, d_k, D, d_pad, compute_dtype,
                              approx_reciprocal)

    out = pl.pallas_call(
        kernel,
        out_shape=jax.ShapeDtypeStruct((B, S, d_pad), x.dtype),
        grid_spec=pltpu.PrefetchScalarGridSpec(
            num_scalar_prefetch=0,
            grid=(B,),
            in_specs=[
                # Batch dim squeezed: kernel sees (S, d_pad).
                pl.BlockSpec((pl.Squeezed(), S, d_pad), lambda b: (b, 0, 0)),  # x
                pl.BlockSpec((d_pad, 3 * d_pad), lambda b: (0, 0)),            # wqkv
                pl.BlockSpec((1, 3 * d_pad), lambda b: (0, 0)),                # bqkv
                pl.BlockSpec((d_pad, d_pad), lambda b: (0, 0)),                # wo
                pl.BlockSpec((1, d_pad), lambda b: (0, 0)),                    # bo
            ],
            out_specs=pl.BlockSpec((pl.Squeezed(), S, d_pad), lambda b: (b, 0, 0)),
            scratch_shapes=[pltpu.VMEM((S, d_pad), compute_dtype)],            # context
        ),
        compiler_params=pltpu.CompilerParams(
            dimension_semantics=("parallel",)),
    )(xp, wqkv, bqkv, wo, bo)

    return out[..., :D] if pad else out


def reference_mhsa(x, params, num_heads):
    """Pure-JAX reference mirroring the PyTorch forward (eval mode)."""
    B, S, D = x.shape
    d_k = D // num_heads

    def lin(x, w, b):  # torch Linear: x @ W.T + b
        return x @ w.T + b

    q = lin(x, params["wq"], params["bq"]).reshape(B, S, num_heads, d_k).transpose(0, 2, 1, 3)
    k = lin(x, params["wk"], params["bk"]).reshape(B, S, num_heads, d_k).transpose(0, 2, 1, 3)
    v = lin(x, params["wv"], params["bv"]).reshape(B, S, num_heads, d_k).transpose(0, 2, 1, 3)
    scores = (q @ k.transpose(0, 1, 3, 2)) / math.sqrt(d_k)
    attn = jax.nn.softmax(scores, axis=-1)
    ctx = (attn @ v).transpose(0, 2, 1, 3).reshape(B, S, D)
    return lin(ctx, params["wo"], params["bo"])


if __name__ == "__main__":
    B, S, D, H = 2, 8, 32, 4

    key = jax.random.PRNGKey(0)
    keys = jax.random.split(key, 9)
    bound = 1.0 / math.sqrt(D)  # PyTorch nn.Linear default init range

    params = {
        "wq": jax.random.uniform(keys[0], (D, D), jnp.float32, -bound, bound),
        "bq": jax.random.uniform(keys[1], (D,), jnp.float32, -bound, bound),
        "wk": jax.random.uniform(keys[2], (D, D), jnp.float32, -bound, bound),
        "bk": jax.random.uniform(keys[3], (D,), jnp.float32, -bound, bound),
        "wv": jax.random.uniform(keys[4], (D, D), jnp.float32, -bound, bound),
        "bv": jax.random.uniform(keys[5], (D,), jnp.float32, -bound, bound),
        "wo": jax.random.uniform(keys[6], (D, D), jnp.float32, -bound, bound),
        "bo": jax.random.uniform(keys[7], (D,), jnp.float32, -bound, bound),
    }
    x = jax.random.normal(keys[8], (B, S, D), jnp.float32)

    ref = reference_mhsa(x, params, H)

    # Fast path: bf16 matmuls (f32 accumulation) + approx softmax reciprocal.
    out_fast = jax.block_until_ready(multi_headed_self_attention(x, params, H))
    assert out_fast.shape == (B, S, D)
    assert jnp.allclose(out_fast, ref, atol=3e-2, rtol=3e-2), "bf16 path mismatch"

    # Exact path: f32 operands + exact reciprocal, matches the f32 reference tightly.
    out_exact = jax.block_until_ready(
        multi_headed_self_attention(x, params, H,
                                    compute_dtype=jnp.float32,
                                    approx_reciprocal=False))
    assert out_exact.shape == (B, S, D)
    assert jnp.allclose(out_exact, ref, atol=2e-4, rtol=2e-4), "f32 path mismatch"

    print("KERNEL_OK")
</pallas_src>

<mosaic_0001>
module attributes {stable_mosaic.version = 11 : i64} {
  func.func @kernel(%arg0: i32, %arg1: memref<1x8x128xbf16, #tpu.memory_space<vmem>>, %arg2: memref<128x384xbf16, #tpu.memory_space<vmem>>, %arg3: memref<1x384xf32, #tpu.memory_space<vmem>>, %arg4: memref<128x128xbf16, #tpu.memory_space<vmem>>, %arg5: memref<1x128xf32, #tpu.memory_space<vmem>>, %arg6: memref<1x8x128xf32, #tpu.memory_space<vmem>>, %arg7: memref<8x128xbf16, #tpu.memory_space<vmem>>) attributes {dimension_semantics = [#tpu.dimension_semantics<parallel>], iteration_bounds = array<i64: 2>, scalar_prefetch = 0 : i64, scratch_operands = 1 : i64, tpu.core_type = #tpu.core_type<tc>, window_params = [{transform_indices = @transform_0, window_bounds = array<i64: 1, 8, 128>}, {pipeline_mode = #tpu.pipeline_mode<synchronous>, transform_indices = @transform_1, window_bounds = array<i64: 128, 384>}, {pipeline_mode = #tpu.pipeline_mode<synchronous>, transform_indices = @transform_2, window_bounds = array<i64: 1, 384>}, {pipeline_mode = #tpu.pipeline_mode<synchronous>, transform_indices = @transform_3, window_bounds = array<i64: 128, 128>}, {pipeline_mode = #tpu.pipeline_mode<synchronous>, transform_indices = @transform_4, window_bounds = array<i64: 1, 128>}, {transform_indices = @transform_5, window_bounds = array<i64: 1, 8, 128>}]} {
    %c0 = arith.constant 0 : index
    %c0_0 = arith.constant 0 : index
    %c0_1 = arith.constant 0 : index
    %0 = vector.load %arg1[%c0, %c0_0, %c0_1] : memref<1x8x128xbf16, #tpu.memory_space<vmem>>, vector<1x8x128xbf16>
    %1 = vector.shape_cast %0 : vector<1x8x128xbf16> to vector<8x128xbf16>
    %c0_2 = arith.constant 0 : index
    %c0_3 = arith.constant 0 : index
    %2 = vector.load %arg2[%c0_2, %c0_3] : memref<128x384xbf16, #tpu.memory_space<vmem>>, vector<128x384xbf16>
    %cst = arith.constant dense<0.000000e+00> : vector<8x384xf32>
    %3 = tpu.matmul %1, %2, %cst {dimension_numbers = #tpu.dot_dimension_numbers<[1], [0], [0], [1], [0, 0, 1, 1], [], []>} : vector<8x128xbf16>, vector<128x384xbf16>, vector<8x384xf32> -> vector<8x384xf32>
    %c0_4 = arith.constant 0 : index
    %c0_5 = arith.constant 0 : index
    %4 = vector.load %arg3[%c0_4, %c0_5] : memref<1x384xf32, #tpu.memory_space<vmem>>, vector<1x384xf32>
    %5 = vector.broadcast %4 : vector<1x384xf32> to vector<8x384xf32>
    %6 = arith.addf %3, %5 : vector<8x384xf32>
    %7 = arith.truncf %6 : vector<8x384xf32> to vector<8x384xbf16>
    %8 = vector.extract_strided_slice %7 {offsets = [0, 0], sizes = [8, 128], strides = [1, 1]} : vector<8x384xbf16> to vector<8x128xbf16>
    %9 = vector.extract_strided_slice %7 {offsets = [0, 128], sizes = [8, 128], strides = [1, 1]} : vector<8x384xbf16> to vector<8x128xbf16>
    %10 = vector.extract_strided_slice %7 {offsets = [0, 256], sizes = [8, 128], strides = [1, 1]} : vector<8x384xbf16> to vector<8x128xbf16>
    %cst_6 = arith.constant 0.000000e+00 : bf16
    %11 = vector.broadcast %cst_6 : bf16 to vector<8x128xbf16>
    %c0_7 = arith.constant 0 : index
    %c0_8 = arith.constant 0 : index
    %12 = vector.load %arg7[%c0_7, %c0_8] : memref<8x128xbf16, #tpu.memory_space<vmem>>, vector<8x128xbf16>
    tpu.vector_store %arg7[%c0_7, %c0_8], %11 {strides = array<i32>} : memref<8x128xbf16, #tpu.memory_space<vmem>>, vector<8x128xbf16>,
    %13 = vector.extract_strided_slice %8 {offsets = [0, 0], sizes = [8, 8], strides = [1, 1]} : vector<8x128xbf16> to vector<8x8xbf16>
    %14 = vector.extract_strided_slice %9 {offsets = [0, 0], sizes = [8, 8], strides = [1, 1]} : vector<8x128xbf16> to vector<8x8xbf16>
    %15 = vector.extract_strided_slice %10 {offsets = [0, 0], sizes = [8, 8], strides = [1, 1]} : vector<8x128xbf16> to vector<8x8xbf16>
    %cst_9 = arith.constant dense<0.000000e+00> : vector<8x8xf32>
    %16 = tpu.matmul %13, %14, %cst_9 {dimension_numbers = #tpu.dot_dimension_numbers<[1], [1], [0], [0], [0, 0, 1, 0], [], []>} : vector<8x8xbf16>, vector<8x8xbf16>, vector<8x8xf32> -> vector<8x8xf32>
    %cst_10 = arith.constant dense<0xFF800000> : vector<8xf32>
    %17 = vector.multi_reduction <maximumf>, %16, %cst_10 [1] : vector<8x8xf32> to vector<8xf32>
    %18 = vector.shape_cast %17 : vector<8xf32> to vector<8x1xf32>
    %19 = vector.broadcast %18 : vector<8x1xf32> to vector<8x8xf32>
    %20 = arith.subf %16, %19 : vector<8x8xf32>
    %21 = math.exp %20 : vector<8x8xf32>
    %cst_11 = arith.constant dense<0.000000e+00> : vector<8xf32>
    %22 = vector.multi_reduction <add>, %21, %cst_11 [1] : vector<8x8xf32> to vector<8xf32>
    %23 = vector.shape_cast %22 : vector<8xf32> to vector<8x1xf32>
    %24 = tpu.reciprocal %23 {approx = true} : vector<8x1xf32> -> vector<8x1xf32>
    %25 = vector.broadcast %24 : vector<8x1xf32> to vector<8x8xf32>
    %26 = arith.mulf %21, %25 : vector<8x8xf32>
    %27 = arith.truncf %26 : vector<8x8xf32> to vector<8x8xbf16>
    %cst_12 = arith.constant dense<0.000000e+00> : vector<8x8xf32>
    %28 = tpu.matmul %27, %15, %cst_12 {dimension_numbers = #tpu.dot_dimension_numbers<[1], [0], [0], [1], [0, 0, 1, 1], [], []>} : vector<8x8xbf16>, vector<8x8xbf16>, vector<8x8xf32> -> vector<8x8xf32>
    %29 = arith.truncf %28 : vector<8x8xf32> to vector<8x8xbf16>
    %c0_13 = arith.constant 0 : index
    %c0_14 = arith.constant 0 : index
    %30 = vector.load %arg7[%c0_13, %c0_14] : memref<8x128xbf16, #tpu.memory_space<vmem>>, vector<8x8xbf16>
    tpu.vector_store %arg7[%c0_13, %c0_14], %29 {strides = array<i32>} : memref<8x128xbf16, #tpu.memory_space<vmem>>, vector<8x8xbf16>,
    %31 = vector.extract_strided_slice %8 {offsets = [0, 8], sizes = [8, 8], strides = [1, 1]} : vector<8x128xbf16> to vector<8x8xbf16>
    %32 = vector.extract_strided_slice %9 {offsets = [0, 8], sizes = [8, 8], strides = [1, 1]} : vector<8x128xbf16> to vector<8x8xbf16>
    %33 = vector.extract_strided_slice %10 {offsets = [0, 8], sizes = [8, 8], strides = [1, 1]} : vector<8x128xbf16> to vector<8x8xbf16>
    %cst_15 = arith.constant dense<0.000000e+00> : vector<8x8xf32>
    %34 = tpu.matmul %31, %32, %cst_15 {dimension_numbers = #tpu.dot_dimension_numbers<[1], [1], [0], [0], [0, 0, 1, 0], [], []>} : vector<8x8xbf16>, vector<8x8xbf16>, vector<8x8xf32> -> vector<8x8xf32>
    %cst_16 = arith.constant dense<0xFF800000> : vector<8xf32>
    %35 = vector.multi_reduction <maximumf>, %34, %cst_16 [1] : vector<8x8xf32> to vector<8xf32>
    %36 = vector.shape_cast %35 : vector<8xf32> to vector<8x1xf32>
    %37 = vector.broadcast %36 : vector<8x1xf32> to vector<8x8xf32>
    %38 = arith.subf %34, %37 : vector<8x8xf32>
    %39 = math.exp %38 : vector<8x8xf32>
    %cst_17 = arith.constant dense<0.000000e+00> : vector<8xf32>
    %40 = vector.multi_reduction <add>, %39, %cst_17 [1] : vector<8x8xf32> to vector<8xf32>
    %41 = vector.shape_cast %40 : vector<8xf32> to vector<8x1xf32>
    %42 = tpu.reciprocal %41 {approx = true} : vector<8x1xf32> -> vector<8x1xf32>
    %43 = vector.broadcast %42 : vector<8x1xf32> to vector<8x8xf32>
    %44 = arith.mulf %39, %43 : vector<8x8xf32>
    %45 = arith.truncf %44 : vector<8x8xf32> to vector<8x8xbf16>
    %cst_18 = arith.constant dense<0.000000e+00> : vector<8x8xf32>
    %46 = tpu.matmul %45, %33, %cst_18 {dimension_numbers = #tpu.dot_dimension_numbers<[1], [0], [0], [1], [0, 0, 1, 1], [], []>} : vector<8x8xbf16>, vector<8x8xbf16>, vector<8x8xf32> -> vector<8x8xf32>
    %47 = arith.truncf %46 : vector<8x8xf32> to vector<8x8xbf16>
    %c0_19 = arith.constant 0 : index
    %c8 = arith.constant 8 : index
    %48 = vector.load %arg7[%c0_19, %c8] : memref<8x128xbf16, #tpu.memory_space<vmem>>, vector<8x8xbf16>
    tpu.vector_store %arg7[%c0_19, %c8], %47 {strides = array<i32>} : memref<8x128xbf16, #tpu.memory_space<vmem>>, vector<8x8xbf16>,
    %49 = vector.extract_strided_slice %8 {offsets = [0, 16], sizes = [8, 8], strides = [1, 1]} : vector<8x128xbf16> to vector<8x8xbf16>
    %50 = vector.extract_strided_slice %9 {offsets = [0, 16], sizes = [8, 8], strides = [1, 1]} : vector<8x128xbf16> to vector<8x8xbf16>
    %51 = vector.extract_strided_slice %10 {offsets = [0, 16], sizes = [8, 8], strides = [1, 1]} : vector<8x128xbf16> to vector<8x8xbf16>
    %cst_20 = arith.constant dense<0.000000e+00> : vector<8x8xf32>
    %52 = tpu.matmul %49, %50, %cst_20 {dimension_numbers = #tpu.dot_dimension_numbers<[1], [1], [0], [0], [0, 0, 1, 0], [], []>} : vector<8x8xbf16>, vector<8x8xbf16>, vector<8x8xf32> -> vector<8x8xf32>
    %cst_21 = arith.constant dense<0xFF800000> : vector<8xf32>
    %53 = vector.multi_reduction <maximumf>, %52, %cst_21 [1] : vector<8x8xf32> to vector<8xf32>
    %54 = vector.shape_cast %53 : vector<8xf32> to vector<8x1xf32>
    %55 = vector.broadcast %54 : vector<8x1xf32> to vector<8x8xf32>
    %56 = arith.subf %52, %55 : vector<8x8xf32>
    %57 = math.exp %56 : vector<8x8xf32>
    %cst_22 = arith.constant dense<0.000000e+00> : vector<8xf32>
    %58 = vector.multi_reduction <add>, %57, %cst_22 [1] : vector<8x8xf32> to vector<8xf32>
    %59 = vector.shape_cast %58 : vector<8xf32> to vector<8x1xf32>
    %60 = tpu.reciprocal %59 {approx = true} : vector<8x1xf32> -> vector<8x1xf32>
    %61 = vector.broadcast %60 : vector<8x1xf32> to vector<8x8xf32>
    %62 = arith.mulf %57, %61 : vector<8x8xf32>
    %63 = arith.truncf %62 : vector<8x8xf32> to vector<8x8xbf16>
    %cst_23 = arith.constant dense<0.000000e+00> : vector<8x8xf32>
    %64 = tpu.matmul %63, %51, %cst_23 {dimension_numbers = #tpu.dot_dimension_numbers<[1], [0], [0], [1], [0, 0, 1, 1], [], []>} : vector<8x8xbf16>, vector<8x8xbf16>, vector<8x8xf32> -> vector<8x8xf32>
    %65 = arith.truncf %64 : vector<8x8xf32> to vector<8x8xbf16>
    %c0_24 = arith.constant 0 : index
    %c16 = arith.constant 16 : index
    %66 = vector.load %arg7[%c0_24, %c16] : memref<8x128xbf16, #tpu.memory_space<vmem>>, vector<8x8xbf16>
    tpu.vector_store %arg7[%c0_24, %c16], %65 {strides = array<i32>} : memref<8x128xbf16, #tpu.memory_space<vmem>>, vector<8x8xbf16>,
    %67 = vector.extract_strided_slice %8 {offsets = [0, 24], sizes = [8, 8], strides = [1, 1]} : vector<8x128xbf16> to vector<8x8xbf16>
    %68 = vector.extract_strided_slice %9 {offsets = [0, 24], sizes = [8, 8], strides = [1, 1]} : vector<8x128xbf16> to vector<8x8xbf16>
    %69 = vector.extract_strided_slice %10 {offsets = [0, 24], sizes = [8, 8], strides = [1, 1]} : vector<8x128xbf16> to vector<8x8xbf16>
    %cst_25 = arith.constant dense<0.000000e+00> : vector<8x8xf32>
    %70 = tpu.matmul %67, %68, %cst_25 {dimension_numbers = #tpu.dot_dimension_numbers<[1], [1], [0], [0], [0, 0, 1, 0], [], []>} : vector<8x8xbf16>, vector<8x8xbf16>, vector<8x8xf32> -> vector<8x8xf32>
    %cst_26 = arith.constant dense<0xFF800000> : vector<8xf32>
    %71 = vector.multi_reduction <maximumf>, %70, %cst_26 [1] : vector<8x8xf32> to vector<8xf32>
    %72 = vector.shape_cast %71 : vector<8xf32> to vector<8x1xf32>
    %73 = vector.broadcast %72 : vector<8x1xf32> to vector<8x8xf32>
    %74 = arith.subf %70, %73 : vector<8x8xf32>
    %75 = math.exp %74 : vector<8x8xf32>
    %cst_27 = arith.constant dense<0.000000e+00> : vector<8xf32>
    %76 = vector.multi_reduction <add>, %75, %cst_27 [1] : vector<8x8xf32> to vector<8xf32>
    %77 = vector.shape_cast %76 : vector<8xf32> to vector<8x1xf32>
    %78 = tpu.reciprocal %77 {approx = true} : vector<8x1xf32> -> vector<8x1xf32>
    %79 = vector.broadcast %78 : vector<8x1xf32> to vector<8x8xf32>
    %80 = arith.mulf %75, %79 : vector<8x8xf32>
    %81 = arith.truncf %80 : vector<8x8xf32> to vector<8x8xbf16>
    %cst_28 = arith.constant dense<0.000000e+00> : vector<8x8xf32>
    %82 = tpu.matmul %81, %69, %cst_28 {dimension_numbers = #tpu.dot_dimension_numbers<[1], [0], [0], [1], [0, 0, 1, 1], [], []>} : vector<8x8xbf16>, vector<8x8xbf16>, vector<8x8xf32> -> vector<8x8xf32>
    %83 = arith.truncf %82 : vector<8x8xf32> to vector<8x8xbf16>
    %c0_29 = arith.constant 0 : index
    %c24 = arith.constant 24 : index
    %84 = vector.load %arg7[%c0_29, %c24] : memref<8x128xbf16, #tpu.memory_space<vmem>>, vector<8x8xbf16>
    tpu.vector_store %arg7[%c0_29, %c24], %83 {strides = array<i32>} : memref<8x128xbf16, #tpu.memory_space<vmem>>, vector<8x8xbf16>,
    %c0_30 = arith.constant 0 : index
    %c0_31 = arith.constant 0 : index
    %85 = vector.load %arg7[%c0_30, %c0_31] : memref<8x128xbf16, #tpu.memory_space<vmem>>, vector<8x128xbf16>
    %c0_32 = arith.constant 0 : index
    %c0_33 = arith.constant 0 : index
    %86 = vector.load %arg4[%c0_32, %c0_33] : memref<128x128xbf16, #tpu.memory_space<vmem>>, vector<128x128xbf16>
    %cst_34 = arith.constant dense<0.000000e+00> : vector<8x128xf32>
    %87 = tpu.matmul %85, %86, %cst_34 {dimension_numbers = #tpu.dot_dimension_numbers<[1], [0], [0], [1], [0, 0, 1, 1], [], []>} : vector<8x128xbf16>, vector<128x128xbf16>, vector<8x128xf32> -> vector<8x128xf32>
    %c0_35 = arith.constant 0 : index
    %c0_36 = arith.constant 0 : index
    %88 = vector.load %arg5[%c0_35, %c0_36] : memref<1x128xf32, #tpu.memory_space<vmem>>, vector<1x128xf32>
    %89 = vector.broadcast %88 : vector<1x128xf32> to vector<8x128xf32>
    %90 = arith.addf %87, %89 : vector<8x128xf32>
    %c0_37 = arith.constant 0 : index
    %c0_38 = arith.constant 0 : index
    %c0_39 = arith.constant 0 : index
    %91 = vector.load %arg6[%c0_37, %c0_38, %c0_39] : memref<1x8x128xf32, #tpu.memory_space<vmem>>, vector<1x8x128xf32>
    %92 = vector.shape_cast %91 : vector<1x8x128xf32> to vector<8x128xf32>
    %93 = vector.shape_cast %90 : vector<8x128xf32> to vector<1x8x128xf32>
    tpu.vector_store %arg6[%c0_37, %c0_38, %c0_39], %93 {strides = array<i32>} : memref<1x8x128xf32, #tpu.memory_space<vmem>>, vector<1x8x128xf32>,
    return
  }
  func.func @transform_0(%arg0: i32) -> (i32, i32, i32) {
    %c0_i32 = arith.constant 0 : i32
    %c0_i32_0 = arith.constant 0 : i32
    %c0_i32_1 = arith.constant 0 : i32
    return %arg0, %c0_i32, %c0_i32_0 : i32, i32, i32
  }
  func.func @transform_1(%arg0: i32) -> (i32, i32) {
    %c0_i32 = arith.constant 0 : i32
    %c0_i32_0 = arith.constant 0 : i32
    %c0_i32_1 = arith.constant 0 : i32
    return %c0_i32, %c0_i32_0 : i32, i32
  }
  func.func @transform_2(%arg0: i32) -> (i32, i32) {
    %c0_i32 = arith.constant 0 : i32
    %c0_i32_0 = arith.constant 0 : i32
    %c0_i32_1 = arith.constant 0 : i32
    return %c0_i32, %c0_i32_0 : i32, i32
  }
  func.func @transform_3(%arg0: i32) -> (i32, i32) {
    %c0_i32 = arith.constant 0 : i32
    %c0_i32_0 = arith.constant 0 : i32
    %c0_i32_1 = arith.constant 0 : i32
    return %c0_i32, %c0_i32_0 : i32, i32
  }
  func.func @transform_4(%arg0: i32) -> (i32, i32) {
    %c0_i32 = arith.constant 0 : i32
    %c0_i32_0 = arith.constant 0 : i32
    %c0_i32_1 = arith.constant 0 : i32
    return %c0_i32, %c0_i32_0 : i32, i32
  }
  func.func @transform_5(%arg0: i32) -> (i32, i32, i32) {
    %c0_i32 = arith.constant 0 : i32
    %c0_i32_0 = arith.constant 0 : i32
    %c0_i32_1 = arith.constant 0 : i32
    return %arg0, %c0_i32, %c0_i32_0 : i32, i32, i32
  }
}

</mosaic_0001>

<llo_original>
// kernel: tpu_custom_call.1
$region0: #{tpu_custom_call.1}
  #allocation0 [shape = 'u32[]', space=smem, size = 0x4, offset = 0x4, fixed_abs, tag = 'smem constant byte address 0x4 - core index']
  #allocation1 [shape = 'u32[72,128]{1,0:T(1,128)}', space=vmem, size = 0x9000, scoped, tag = 'internal scratch']
  #allocation2 [shape = 'bf16[8,128]{1,0:T(8,128)(2,1)}', space=vmem, size = 0x800, scoped, tag = 'scratch operand']
  %s0 = inlined_call_operand.hbm [shape: bf16[2,8,128], index: 0, kind: input, shape index: {}]
  %s1 = inlined_call_operand.hbm [shape: bf16[128,384], index: 1, kind: input, shape index: {}]
  %s2 = inlined_call_operand.hbm [shape: f32[1,384], index: 2, kind: input, shape index: {}]
  %s3 = inlined_call_operand.hbm [shape: bf16[128,128], index: 3, kind: input, shape index: {}]
  %s4 = inlined_call_operand.vmem [shape: f32[1,128], index: 4, kind: input, shape index: {}]
  %s5 = inlined_call_operand.hbm [shape: f32[2,8,128], index: 5, kind: output, shape index: {}]
  %s6 = sld [smem:[#allocation0]]
  $region69: #{tpu_custom_call.1} parent=0
    _
  %s8 = ssub.s32 1, %s6
  %s9 = scalar_select 0, %s8, %s6
  $region1: #{tpu_custom_call.1} parent=0
    #allocation3 [shape = 'u8[4096]{0}', space=vmem, size = 0x1000, scoped, tag = 'input window, operand 0']
    #allocation4 [shape = 's32[2]{0}', space=sflag, size = 0x8, scoped, tag = 'scoped memory for tpu_custom_call.1']
    #allocation5 [shape = 's32[2]{0}', space=sflag, size = 0x8, scoped, tag = 'scoped memory for tpu_custom_call.1']
    #allocation6 [shape = 'u8[98304]{0}', space=vmem, size = 0x18000, scoped, tag = 'input window, operand 1, single buffered']
    #allocation7 [shape = 's32[1]{0}', space=sflag, size = 0x4, scoped, tag = 'scoped memory for tpu_custom_call.1']
    #allocation8 [shape = 'u8[1536]{0}', space=vmem, size = 0x800, scoped, tag = 'input window, operand 2, single buffered']
    #allocation9 [shape = 'u8[32768]{0}', space=vmem, size = 0x8000, scoped, tag = 'input window, operand 3, single buffered']
    #allocation10 [shape = 's32[1]{0}', space=sflag, size = 0x4, scoped, tag = 'scoped memory for tpu_custom_call.1']
    #allocation11 [shape = 'u8[8192]{0}', space=vmem, size = 0x2000, scoped, tag = 'output window, operand 0']
    %10 = vsyncpa [#allocation4], 0
    %s11 = scalar_lea.sflag [#allocation4], 1
    %12 = vsyncpa %s11, 0
    %13 = vsyncpa [#allocation7], 0
    %14 = vsyncpa [#allocation10], 0
    %15 = vsyncpa [#allocation5], 0
    %s16 = scalar_lea.sflag [#allocation5], 1
    %17 = vsyncpa %s16, 0
    loop: start=0, step=1, limit=4
    $region2: #{tpu_custom_call.1} parent=1 // loop_pre_header
      _
    $region3: #{tpu_custom_call.1} parent=1 // loop_header
      %s19 = sphi 0, %s23
      %p20 = scmp.ge.s32.totalorder %s19, 4
      %s29 = sphi 0, %s31
      %s32 = sphi 0, %s29
      %s33 = sphi 0, %s32
      %s49 = sphi 0, %s33
      %s53 = sphi 0, %s53
      %s55 = sphi 0, %s53
      %s56 = sphi 0, %s55
      %s70 = sphi 0, %s56
      %s74 = sphi 0, %s74
      %s76 = sphi 0, %s74
      %s77 = sphi 0, %s76
      %s91 = sphi 0, %s77
      %s95 = sphi 0, %s95
      %s97 = sphi 0, %s95
      %s98 = sphi 0, %s97
      %s112 = sphi 0, %s98
      %s116 = sphi 0, %s116
      %s118 = sphi 0, %s116
      %s119 = sphi 0, %s118
      %s133 = sphi 0, %s119
      %s139 = sphi 0, %s141
      %s142 = sphi 0, %s139
      %s143 = sphi 0, %s142
      %s159 = sphi 0, %s143
    $region4: #{tpu_custom_call.1} parent=1 // loop_header_branch
      %22 = sbr.rel (%p20) target = $region8
    $region5: #{tpu_custom_call.1} parent=1 // loop_body
      %s24 = ssub.s32 %s19, 1
      %s25 = ssub.s32 %s19, 2
      %s26 = sadd.s32 %s19, 1
      %s27 = ssub.s32 %s19, %s26
      %p28 = scmp.eq.s32.totalorder %s27, 0
      %s30 = sadd.s32 %s29, 1
      %s31 = scalar_select %p28, %s29, %s30
      %p34 = pneg %p28
      %p35 = scmp.eq.s32.totalorder %s19, 1
      %p36 = por %p34, %p35
      %p37 = scmp.ne.s32.totalorder %s29, %s32
      %p38 = scmp.eq.s32.totalorder %s19, 0
      %p39 = por %p37, %p38
      %p40 = scmp.ne.s32.totalorder %s29, %s32
      %p41 = scmp.eq.s32.totalorder %s24, 1
      %p42 = por %p40, %p41
      %p43 = scmp.ne.s32.totalorder %s32, %s33
      %p44 = scmp.eq.s32.totalorder %s24, 0
      %p45 = por %p43, %p44
      %p46 = scmp.ne.s32.totalorder %s32, %s33
      %p47 = scmp.eq.s32.totalorder %s25, 1
      %p48 = por %p46, %p47
      %p50 = scmp.ne.s32.totalorder %s33, %s49
      %p51 = scmp.eq.s32.totalorder %s25, 0
      %p52 = por %p50, %p51
      %s54 = sadd.s32 %s53, 1
      %p57 = scmp.eq.s32.totalorder %s19, 1
      %p58 = scmp.ne.s32.totalorder %s53, %s55
      %p59 = scmp.eq.s32.totalorder %s19, 0
      %p60 = por %p58, %p59
      %p61 = scmp.ne.s32.totalorder %s53, %s55
      %p62 = scmp.eq.s32.totalorder %s24, 1
      %p63 = por %p61, %p62
      %p64 = scmp.ne.s32.totalorder %s55, %s56
      %p65 = scmp.eq.s32.totalorder %s24, 0
      %p66 = por %p64, %p65
      %p67 = scmp.ne.s32.totalorder %s55, %s56
      %p68 = scmp.eq.s32.totalorder %s25, 1
      %p69 = por %p67, %p68
      %p71 = scmp.ne.s32.totalorder %s56, %s70
      %p72 = scmp.eq.s32.totalorder %s25, 0
      %p73 = por %p71, %p72
      %s75 = sadd.s32 %s74, 1
      %p78 = scmp.eq.s32.totalorder %s19, 1
      %p79 = scmp.ne.s32.totalorder %s74, %s76
      %p80 = scmp.eq.s32.totalorder %s19, 0
      %p81 = por %p79, %p80
      %p82 = scmp.ne.s32.totalorder %s74, %s76
      %p83 = scmp.eq.s32.totalorder %s24, 1
      %p84 = por %p82, %p83
      %p85 = scmp.ne.s32.totalorder %s76, %s77
      %p86 = scmp.eq.s32.totalorder %s24, 0
      %p87 = por %p85, %p86
      %p88 = scmp.ne.s32.totalorder %s76, %s77
      %p89 = scmp.eq.s32.totalorder %s25, 1
      %p90 = por %p88, %p89
      %p92 = scmp.ne.s32.totalorder %s77, %s91
      %p93 = scmp.eq.s32.totalorder %s25, 0
      %p94 = por %p92, %p93
      %s96 = sadd.s32 %s95, 1
      %p99 = scmp.eq.s32.totalorder %s19, 1
      %p100 = scmp.ne.s32.totalorder %s95, %s97
      %p101 = scmp.eq.s32.totalorder %s19, 0
      %p102 = por %p100, %p101
      %p103 = scmp.ne.s32.totalorder %s95, %s97
      %p104 = scmp.eq.s32.totalorder %s24, 1
      %p105 = por %p103, %p104
      %p106 = scmp.ne.s32.totalorder %s97, %s98
      %p107 = scmp.eq.s32.totalorder %s24, 0
      %p108 = por %p106, %p107
      %p109 = scmp.ne.s32.totalorder %s97, %s98
      %p110 = scmp.eq.s32.totalorder %s25, 1
      %p111 = por %p109, %p110
      %p113 = scmp.ne.s32.totalorder %s98, %s112
      %p114 = scmp.eq.s32.totalorder %s25, 0
      %p115 = por %p113, %p114
      %s117 = sadd.s32 %s116, 1
      %p120 = scmp.eq.s32.totalorder %s19, 1
      %p121 = scmp.ne.s32.totalorder %s116, %s118
      %p122 = scmp.eq.s32.totalorder %s19, 0
      %p123 = por %p121, %p122
      %p124 = scmp.ne.s32.totalorder %s116, %s118
      %p125 = scmp.eq.s32.totalorder %s24, 1
      %p126 = por %p124, %p125
      %p127 = scmp.ne.s32.totalorder %s118, %s119
      %p128 = scmp.eq.s32.totalorder %s24, 0
      %p129 = por %p127, %p128
      %p130 = scmp.ne.s32.totalorder %s118, %s119
      %p131 = scmp.eq.s32.totalorder %s25, 1
      %p132 = por %p130, %p131
      %p134 = scmp.ne.s32.totalorder %s119, %s133
      %p135 = scmp.eq.s32.totalorder %s25, 0
      %p136 = por %p134, %p135
      %s137 = ssub.s32 %s19, %s26
      %p138 = scmp.eq.s32.totalorder %s137, 0
      %s140 = sadd.s32 %s139, 1
      %s141 = scalar_select %p138, %s139, %s140
      %p144 = pneg %p138
      %p145 = scmp.eq.s32.totalorder %s19, 1
      %p146 = por %p144, %p145
      %p147 = scmp.ne.s32.totalorder %s139, %s142
      %p148 = scmp.eq.s32.totalorder %s19, 0
      %p149 = por %p147, %p148
      %p150 = scmp.ne.s32.totalorder %s139, %s142
      %p151 = scmp.eq.s32.totalorder %s24, 1
      %p152 = por %p150, %p151
      %p153 = scmp.ne.s32.totalorder %s142, %s143
      %p154 = scmp.eq.s32.totalorder %s24, 0
      %p155 = por %p153, %p154
      %p156 = scmp.ne.s32.totalorder %s142, %s143
      %p157 = scmp.eq.s32.totalorder %s25, 1
      %p158 = por %p156, %p157
      %p160 = scmp.ne.s32.totalorder %s143, %s159
      %p161 = scmp.eq.s32.totalorder %s25, 0
      %p162 = por %p160, %p161
      %p163 = scmp.le.s32.totalorder 1, %s19
      %p164 = scmp.lt.s32.totalorder %s19, 3
      %p165 = pnand %p163, %p164
      %p166 = pneg %p165
      // Predicated region
      $region9: #{tpu_custom_call.1} parent=5 // pred_check
        _
      $region10: #{tpu_custom_call.1} parent=5 // pred_check_branch
        %168 = sbr.rel (%p165) target = $region12
      $region11: #{tpu_custom_call.1} parent=5 // pred_region
        %s169 = ssub.s32 %s19, 1
        // Predicated region
        $region13: #{tpu_custom_call.1} parent=11 // pred_check
          %p170 = pneg %p66
        $region14: #{tpu_custom_call.1} parent=11 // pred_check_branch
          %172 = sbr.rel (%p170) target = $region16
        $region15: #{tpu_custom_call.1} parent=11 // pred_region
          %174 = vsyncadd [#allocation7], 0
          %s175 = sshll.u32 %s1, 4
          %s176 = int_to_ptr.hbm [resolvable:$true] %s175
          %s177 = sshll.u32 [#allocation6], 4
          %s178 = int_to_ptr.vmem [resolvable:$true] %s177
          %183 = dma.hbm_to_vmem [thread:$0]  %s176, 3072, %s178, [#allocation7], 192, 192, 12
        $region16: #{tpu_custom_call.1} parent=11 // pred_fallthru
          _
        // Predicated region
        $region17: #{tpu_custom_call.1} parent=11 // pred_check
          %p184 = pneg %p87
        $region18: #{tpu_custom_call.1} parent=11 // pred_check_branch
          %186 = sbr.rel (%p184) target = $region20
        $region19: #{tpu_custom_call.1} parent=11 // pred_region
          %188 = vsyncadd [#allocation7], 0
          %s190 = sshll.u32 %s2, 4
          %s191 = int_to_ptr.hbm [resolvable:$true] %s190
          %s192 = sshll.u32 [#allocation8], 4
          %s193 = int_to_ptr.vmem [resolvable:$true] %s192
          %195 = dma.hbm_to_vmem [thread:$0]  %s191, 48, %s193, [#allocation7]
        $region20: #{tpu_custom_call.1} parent=11 // pred_fallthru
          _
        // Predicated region
        $region21: #{tpu_custom_call.1} parent=11 // pred_check
          %p196 = pneg %p108
        $region22: #{tpu_custom_call.1} parent=11 // pred_check_branch
          %198 = sbr.rel (%p196) target = $region24
        $region23: #{tpu_custom_call.1} parent=11 // pred_region
          %200 = vsyncadd [#allocation10], 0
          %s201 = sshll.u32 %s3, 4
          %s202 = int_to_ptr.hbm [resolvable:$true] %s201
          %s203 = sshll.u32 [#allocation9], 4
          %s204 = int_to_ptr.vmem [resolvable:$true] %s203
          %209 = dma.hbm_to_vmem [thread:$0]  %s202, 1024, %s204, [#allocation10], 64, 64, 4
        $region24: #{tpu_custom_call.1} parent=11 // pred_fallthru
          _
        // Predicated region
        $region25: #{tpu_custom_call.1} parent=11 // pred_check
          %p210 = pneg %p129
        $region26: #{tpu_custom_call.1} parent=11 // pred_check_branch
          %212 = sbr.rel (%p210) target = $region28
        $region27: #{tpu_custom_call.1} parent=11 // pred_region
          _
        $region28: #{tpu_custom_call.1} parent=11 // pred_fallthru
          _
      $region12: #{tpu_custom_call.1} parent=5 // pred_fallthru
        _
      %p213 = scmp.lt.s32.totalorder %s19, 2
      // Predicated region
      $region29: #{tpu_custom_call.1} parent=5 // pred_check
        %p214 = pneg %p213
      $region30: #{tpu_custom_call.1} parent=5 // pred_check_branch
        %216 = sbr.rel (%p214) target = $region32
      $region31: #{tpu_custom_call.1} parent=5 // pred_region
        // Predicated region
        $region33: #{tpu_custom_call.1} parent=31 // pred_check
          %p217 = pneg %p39
        $region34: #{tpu_custom_call.1} parent=31 // pred_check_branch
          %219 = sbr.rel (%p217) target = $region36
        $region35: #{tpu_custom_call.1} parent=31 // pred_region
          %s220 = sand.u32 %s29, 1
          %s221 = scalar_lea.sflag [#allocation4], %s220
          %s222 = sand.u32 %s29, 1
          %s223 = smul.addr %s222, 4
          %s224 = scalar_lea.vmem [#allocation3], %s223
          %226 = vsyncadd %s221, 0
          %s227 = smul.addr %s19, 4
          %s228 = scalar_lea.hbm %s0, %s227
          %s230 = sshll.u32 %s228, 4
          %s231 = int_to_ptr.hbm [resolvable:$true] %s230
          %s232 = sshll.u32 %s224, 4
          %s233 = int_to_ptr.vmem [resolvable:$true] %s232
          %235 = dma.hbm_to_vmem [thread:$0]  %s231, 64, %s233, %s221
        $region36: #{tpu_custom_call.1} parent=31 // pred_fallthru
          _
      $region32: #{tpu_custom_call.1} parent=5 // pred_fallthru
        _
      %p236 = scmp.le.s32.totalorder 1, %s19
      %p237 = scmp.lt.s32.totalorder %s19, 3
      %p238 = pnand %p236, %p237
      %p239 = pneg %p238
      // Predicated region
      $region37: #{tpu_custom_call.1} parent=5 // pred_check
        _
      $region38: #{tpu_custom_call.1} parent=5 // pred_check_branch
        %241 = sbr.rel (%p238) target = $region40
      $region39: #{tpu_custom_call.1} parent=5 // pred_region
        %s242 = ssub.s32 %s19, 1
        %s243 = sand.u32 %s32, 1
        %s244 = scalar_lea.sflag [#allocation4], %s243
        %s245 = sand.u32 %s32, 1
        %s246 = smul.addr %s245, 4
        %s247 = scalar_lea.vmem [#allocation3], %s246
        // Predicated region
        $region41: #{tpu_custom_call.1} parent=39 // pred_check
          %p248 = pneg %p45
        $region42: #{tpu_custom_call.1} parent=39 // pred_check_branch
          %250 = sbr.rel (%p248) target = $region44
        $region43: #{tpu_custom_call.1} parent=39 // pred_region
          %252 = dma.done %s244, 64
        $region44: #{tpu_custom_call.1} parent=39 // pred_fallthru
          _
        // Predicated region
        $region45: #{tpu_custom_call.1} parent=39 // pred_check
          %p253 = pneg %p66
        $region46: #{tpu_custom_call.1} parent=39 // pred_check_branch
          %255 = sbr.rel (%p253) target = $region48
        $region47: #{tpu_custom_call.1} parent=39 // pred_region
          %257 = dma.done [#allocation7], 3072
        $region48: #{tpu_custom_call.1} parent=39 // pred_fallthru
          _
        // Predicated region
        $region49: #{tpu_custom_call.1} parent=39 // pred_check
          %p258 = pneg %p87
        $region50: #{tpu_custom_call.1} parent=39 // pred_check_branch
          %260 = sbr.rel (%p258) target = $region52
        $region51: #{tpu_custom_call.1} parent=39 // pred_region
          %262 = dma.done [#allocation7], 48
        $region52: #{tpu_custom_call.1} parent=39 // pred_fallthru
          _
        // Predicated region
        $region53: #{tpu_custom_call.1} parent=39 // pred_check
          %p263 = pneg %p108
        $region54: #{tpu_custom_call.1} parent=39 // pred_check_branch
          %265 = sbr.rel (%p263) target = $region56
        $region55: #{tpu_custom_call.1} parent=39 // pred_region
          %267 = dma.done [#allocation10], 1024
        $region56: #{tpu_custom_call.1} parent=39 // pred_fallthru
          _
        %s268 = sand.u32 %s32, 1
        %s269 = scalar_lea.sflag [#allocation4], %s268
        %s270 = sand.u32 %s32, 1
        %s271 = smul.addr %s270, 4
        %s272 = scalar_lea.vmem [#allocation3], %s271
        %p273 = pneg %p45
        %p274 = pneg %p42
        %p275 = pneg %p66
        %p276 = pneg %p63
        %p277 = pneg %p87
        %p278 = pneg %p84
        %p279 = pneg %p108
        %p280 = pneg %p105
        %p281 = pneg %p129
        %p282 = pneg %p126
        %p283 = pneg %p155
        %p284 = pneg %p152
        %s285 = sand.u32 %s142, 1
        %s286 = scalar_lea.sflag [#allocation5], %s285
        %s287 = sand.u32 %s142, 1
        %s288 = smul.addr %s287, 8
        %s289 = scalar_lea.vmem [#allocation11], %s288
        %v291 = vld [vmem:[%s247] sm:$0xf]
        %v292 = vld [vmem:[#allocation6] sm:$0xff]
        %v293 = vld [vmem:[#allocation6 + $0x8] sm:$0xf]
        %v294 = vld [vmem:[#allocation6 + $0xc] sm:$0xff]
        %v295 = vld [vmem:[#allocation6 + $0x14] sm:$0xf]
        %v296 = vld [vmem:[#allocation6 + $0x18] sm:$0xff]
        %v297 = vld [vmem:[#allocation6 + $0x20] sm:$0xf]
        %v298 = vld [vmem:[#allocation6 + $0x24] sm:$0xff]
        %v299 = vld [vmem:[#allocation6 + $0x2c] sm:$0xf]
        %v300 = vld [vmem:[#allocation6 + $0x30] sm:$0xff]
        %v301 = vld [vmem:[#allocation6 + $0x38] sm:$0xf]
        %v302 = vld [vmem:[#allocation6 + $0x3c] sm:$0xff]
        %v303 = vld [vmem:[#allocation6 + $0x44] sm:$0xf]
        %v304 = vld [vmem:[#allocation6 + $0x48] sm:$0xff]
        %v305 = vld [vmem:[#allocation6 + $0x50] sm:$0xf]
        %v306 = vld [vmem:[#allocation6 + $0x54] sm:$0xff]
        %v307 = vld [vmem:[#allocation6 + $0x5c] sm:$0xf]
        %v308 = vld [vmem:[#allocation6 + $0x60] sm:$0xff]
        %v309 = vld [vmem:[#allocation6 + $0x68] sm:$0xf]
        %v310 = vld [vmem:[#allocation6 + $0x6c] sm:$0xff]
        %v311 = vld [vmem:[#allocation6 + $0x74] sm:$0xf]
        %v312 = vld [vmem:[#allocation6 + $0x78] sm:$0xff]
        %v313 = vld [vmem:[#allocation6 + $0x80] sm:$0xf]
        %v314 = vld [vmem:[#allocation6 + $0x84] sm:$0xff]
        %v315 = vld [vmem:[#allocation6 + $0x8c] sm:$0xf]
        %v316 = vld [vmem:[#allocation6 + $0x90] sm:$0xff]
        %v317 = vld [vmem:[#allocation6 + $0x98] sm:$0xf]
        %v318 = vld [vmem:[#allocation6 + $0x9c] sm:$0xff]
        %v319 = vld [vmem:[#allocation6 + $0xa4] sm:$0xf]
        %v320 = vld [vmem:[#allocation6 + $0xa8] sm:$0xff]
        %v321 = vld [vmem:[#allocation6 + $0xb0] sm:$0xf]
        %v322 = vld [vmem:[#allocation6 + $0xb4] sm:$0xff]
        %v323 = vld [vmem:[#allocation6 + $0xbc] sm:$0xf]
        %v324 = vld [vmem:[#allocation8] sm:$0x7]
        %v326 = vperm.slane %v324, 0
        %v327 = vperm.slane %v324, 1
        %v328 = vperm.slane %v324, 2
        %v364 = vunpack.c.l.b16 %v292
        %v365 = vunpack.c.h.b16 %v292
        %v366 = vunpack.c.l.b16 %v293
        %v367 = vunpack.c.l.b16 %v294
        %v368 = vunpack.c.h.b16 %v294
        %v369 = vunpack.c.l.b16 %v295
        %v370 = vunpack.c.l.b16 %v296
        %v371 = vunpack.c.h.b16 %v296
        %v372 = vunpack.c.l.b16 %v297
        %v373 = vunpack.c.l.b16 %v298
        %v374 = vunpack.c.h.b16 %v298
        %v375 = vunpack.c.l.b16 %v299
        %v376 = vunpack.c.l.b16 %v300
        %v377 = vunpack.c.h.b16 %v300
        %v378 = vunpack.c.l.b16 %v301
        %v379 = vunpack.c.l.b16 %v302
        %v380 = vunpack.c.h.b16 %v302
        %v381 = vunpack.c.l.b16 %v303
        %v382 = vunpack.c.l.b16 %v304
        %v383 = vunpack.c.h.b16 %v304
        %v384 = vunpack.c.l.b16 %v305
        %v385 = vunpack.c.l.b16 %v306
        %v386 = vunpack.c.h.b16 %v306
        %v387 = vunpack.c.l.b16 %v307
        %v388 = vunpack.c.l.b16 %v308
        %v389 = vunpack.c.h.b16 %v308
        %v390 = vunpack.c.l.b16 %v309
        %v391 = vunpack.c.l.b16 %v310
        %v392 = vunpack.c.h.b16 %v310
        %v393 = vunpack.c.l.b16 %v311
        %v394 = vunpack.c.l.b16 %v312
        %v395 = vunpack.c.h.b16 %v312
        %v396 = vunpack.c.l.b16 %v313
        %v397 = vunpack.c.l.b16 %v314
        %v398 = vunpack.c.h.b16 %v314
        %v399 = vunpack.c.l.b16 %v315
        %v400 = vunpack.c.l.b16 %v316
        %v401 = vunpack.c.h.b16 %v316
        %v402 = vunpack.c.l.b16 %v317
        %v403 = vunpack.c.l.b16 %v318
        %v404 = vunpack.c.h.b16 %v318
        %v405 = vunpack.c.l.b16 %v319
        %v406 = vunpack.c.l.b16 %v320
        %v407 = vunpack.c.h.b16 %v320
        %v408 = vunpack.c.l.b16 %v321
        %v409 = vunpack.c.l.b16 %v322
        %v410 = vunpack.c.h.b16 %v322
        %v411 = vunpack.c.l.b16 %v323
        %v412 = vpack.c.b16 %v367, %v364
        %v413 = vpack.c.b16 %v368, %v365
        %v414 = vpack.c.b16 %v369, %v366
        %v415 = vpack.c.b16 %v373, %v370
        %v416 = vpack.c.b16 %v374, %v371
        %v417 = vpack.c.b16 %v375, %v372
        %v418 = vpack.c.b16 %v379, %v376
        %v419 = vpack.c.b16 %v380, %v377
        %v420 = vpack.c.b16 %v381, %v378
        %v421 = vpack.c.b16 %v385, %v382
        %v422 = vpack.c.b16 %v386, %v383
        %v423 = vpack.c.b16 %v387, %v384
        %v424 = vpack.c.b16 %v391, %v388
        %v425 = vpack.c.b16 %v392, %v389
        %v426 = vpack.c.b16 %v393, %v390
        %v427 = vpack.c.b16 %v397, %v394
        %v428 = vpack.c.b16 %v398, %v395
        %v429 = vpack.c.b16 %v399, %v396
        %v430 = vpack.c.b16 %v403, %v400
        %v431 = vpack.c.b16 %v404, %v401
        %v432 = vpack.c.b16 %v405, %v402
        %v433 = vpack.c.b16 %v409, %v406
        %v434 = vpack.c.b16 %v410, %v407
        %v435 = vpack.c.b16 %v411, %v408
        %460 = vmatpush.bf16.msra.mxu0 %v433
        %461 = vmatpush.bf16.msra.mxu0 %v430
        %462 = vmatpush.bf16.msra.mxu0 %v427
        %463 = vmatpush.bf16.msra.mxu0 %v424
        %464 = vmatpush.bf16.msra.mxu0 %v421
        %465 = vmatpush.bf16.msra.mxu0 %v418
        %466 = vmatpush.bf16.msra.mxu0 %v415
        %467 = vmatpush.bf16.msra.mxu0 %v412
        %468 = vmatmul.bf16.gmra.mxu0 %v291
        %v469 = vpop.f32.mrf.mxu0
        %v470 = vadd.f32 %v326, %v469
        %v471 = vpop.f32.mrf.mxu0
        %472 = vdwg.mxu0
        %473 = vmatpush.bf16.msra.mxu0 %v434
        %474 = vmatpush.bf16.msra.mxu0 %v431
        %475 = vmatpush.bf16.msra.mxu0 %v428
        %476 = vmatpush.bf16.msra.mxu0 %v425
        %477 = vmatpush.bf16.msra.mxu0 %v422
        %478 = vmatpush.bf16.msra.mxu0 %v419
        %479 = vmatpush.bf16.msra.mxu0 %v416
        %480 = vmatpush.bf16.msra.mxu0 %v413
        %481 = vmatmul.bf16.gmra.mxu0 %v291
        %v482 = vpop.f32.mrf.mxu0
        %v483 = vadd.f32 %v327, %v482
        %v484 = vpop.f32.mrf.mxu0
        %485 = vdwg.mxu0
        %486 = vmatpush.bf16.msra.mxu0 %v435
        %487 = vmatpush.bf16.msra.mxu0 %v432
        %488 = vmatpush.bf16.msra.mxu0 %v429
        %489 = vmatpush.bf16.msra.mxu0 %v426
        %490 = vmatpush.bf16.msra.mxu0 %v423
        %491 = vmatpush.bf16.msra.mxu0 %v420
        %492 = vmatpush.bf16.msra.mxu0 %v417
        %493 = vmatpush.bf16.msra.mxu0 %v414
        %494 = vmatmul.bf16.gmra.mxu0 %v291
        %v495 = vpop.f32.mrf.mxu0
        %v496 = vadd.f32 %v328, %v495
        %v497 = vpop.f32.mrf.mxu0
        %498 = vdwg.mxu0
        %v499 = vpack.c.bf16 %v483, %v470
        %v500 = vpack.c.bf16 %v496, %v496
        %501 = vst [vmem:[#allocation2] sm:$0xf] 0
        %v503 = vunpack.c.h.b16 %v499
        %v504 = vpack.c.b16 %v503, %v503
        %vm505 = vcmask 64512
        %v507 = vsel %vm505, %v499, 0
        %v510 = vsel %vm505, %v504, 0
        %512 = vmatpush.bf16.xpose.msra.mxu0 0
        %513 = vmatpush.bf16.xpose.msra.mxu0 0
        %514 = vmatpush.bf16.xpose.msra.mxu0 0
        %515 = vmatpush.bf16.xpose.msra.mxu0 0
        %516 = vmatpush.bf16.xpose.msra.mxu0 0
        %517 = vmatpush.bf16.xpose.msra.mxu0 0
        %518 = vmatpush.bf16.xpose.msra.mxu0 0
        %519 = vmatpush.bf16.xpose.msra.mxu0 %v510
        %520 = vmatmul.bf16.gmra.mxu0 %v507
        %v521 = vpop.f32.mrf.mxu0
        %v522 = vadd.f32 0.0, %v521
        %v523 = vpop.f32.mrf.mxu0
        %524 = vdwg.mxu0
        %v525 = vsel %vm505, %v522, -inf
        %526 = vmax.xlane.f32.xlu0 %v525
        %v527 = vpop.xlane.xlu0 %526
        %v528 = vsub.f32 %v522, %v527
        %v529 = vmul.f32 %v528, 1.442695
        %v530 = vpow.pop %v529
        %v531 = vsel %vm505, %v530, 0.0
        %532 = vadd.xlane.f32.xlu0 %v531
        %v533 = vpop.xlane.xlu0 %532
        %v534 = vrcp.pop %v533
        %v535 = vmul.f32 %v530, %v534
        %v536 = vpack.c.bf16 %v535, %v535
        %v538 = vsel %vm505, %v536, 0
        %vm540 = vcmask 1043456
        %v542 = vsel %vm540, %v500, 0
        %544 = vmatpush.bf16.msra.mxu0 0
        %545 = vmatpush.bf16.msra.mxu0 0
        %546 = vmatpush.bf16.msra.mxu0 0
        %547 = vmatpush.bf16.msra.mxu0 0
        %548 = vmatpush.bf16.msra.mxu0 0
        %549 = vmatpush.bf16.msra.mxu0 0
        %550 = vmatpush.bf16.msra.mxu0 0
        %551 = vmatpush.bf16.msra.mxu0 %v542
        %552 = vmatmul.bf16.gmra.mxu0 %v538
        %v553 = vpop.f32.mrf.mxu0
        %v554 = vadd.f32 0.0, %v553
        %v555 = vpop.f32.mrf.mxu0
        %556 = vdwg.mxu0
        %v557 = vpack.c.bf16 %v554, %v554
        %vm558 = vcmask 60416
        %559 = vst.msk [vmem:[#allocation2] sm:$0xf] %vm558, %v557
        %v560 = vunpack.c.l.b16 %v499
        %v561 = vpack.c.b16 %v560, %v560
        %562 = vrot.lane.b32.xlu0 %v561, 120
        %v563 = vpop.permute.xlu0 %562
        %564 = vrot.lane.b32.xlu0 %v504, 120
        %v565 = vpop.permute.xlu0 %564
        %v567 = vsel %vm505, %v563, 0
        %v570 = vsel %vm505, %v565, 0
        %572 = vmatpush.bf16.xpose.msra.mxu0 0
        %573 = vmatpush.bf16.xpose.msra.mxu0 0
        %574 = vmatpush.bf16.xpose.msra.mxu0 0
        %575 = vmatpush.bf16.xpose.msra.mxu0 0
        %576 = vmatpush.bf16.xpose.msra.mxu0 0
        %577 = vmatpush.bf16.xpose.msra.mxu0 0
        %578 = vmatpush.bf16.xpose.msra.mxu0 0
        %579 = vmatpush.bf16.xpose.msra.mxu0 %v570
        %580 = vmatmul.bf16.gmra.mxu0 %v567
        %v581 = vpop.f32.mrf.mxu0
        %v582 = vadd.f32 0.0, %v581
        %v583 = vpop.f32.mrf.mxu0
        %584 = vdwg.mxu0
        %v585 = vsel %vm505, %v582, -inf
        %586 = vmax.xlane.f32.xlu0 %v585
        %v587 = vpop.xlane.xlu0 %586
        %v588 = vsub.f32 %v582, %v587
        %v589 = vmul.f32 %v588, 1.442695
        %v590 = vpow.pop %v589
        %v591 = vsel %vm505, %v590, 0.0
        %592 = vadd.xlane.f32.xlu0 %v591
        %v593 = vpop.xlane.xlu0 %592
        %v594 = vrcp.pop %v593
        %v595 = vmul.f32 %v590, %v594
        %v596 = vpack.c.bf16 %v595, %v595
        %v598 = vunpack.c.l.b16 %v500
        %v599 = vpack.c.b16 %v598, %v598
        %600 = vrot.lane.b32.xlu0 %v599, 120
        %v601 = vpop.permute.xlu0 %600
        %v603 = vsel %vm505, %v596, 0
        %v606 = vsel %vm540, %v601, 0
        %608 = vmatpush.bf16.msra.mxu0 0
        %609 = vmatpush.bf16.msra.mxu0 0
        %610 = vmatpush.bf16.msra.mxu0 0
        %611 = vmatpush.bf16.msra.mxu0 0
        %612 = vmatpush.bf16.msra.mxu0 0
        %613 = vmatpush.bf16.msra.mxu0 0
        %614 = vmatpush.bf16.msra.mxu0 0
        %615 = vmatpush.bf16.msra.mxu0 %v606
        %616 = vmatmul.bf16.gmra.mxu0 %v603
        %v617 = vpop.f32.mrf.mxu0
        %v618 = vadd.f32 0.0, %v617
        %v619 = vpop.f32.mrf.mxu0
        %620 = vdwg.mxu0
        %v621 = vpack.c.bf16 %v618, %v618
        %623 = vrot.lane.b32.xlu0 %v621, 8
        %v624 = vpop.permute.xlu0 %623
        %vm626 = vcmask 126016
        %627 = vst.msk [vmem:[#allocation2] sm:$0xf] %vm626, %v624
        %628 = vrot.lane.b32.xlu0 %v561, 112
        %v629 = vpop.permute.xlu0 %628
        %630 = vrot.lane.b32.xlu0 %v504, 112
        %v631 = vpop.permute.xlu0 %630
        %v633 = vsel %vm505, %v629, 0
        %v636 = vsel %vm505, %v631, 0
        %638 = vmatpush.bf16.xpose.msra.mxu0 0
        %639 = vmatpush.bf16.xpose.msra.mxu0 0
        %640 = vmatpush.bf16.xpose.msra.mxu0 0
        %641 = vmatpush.bf16.xpose.msra.mxu0 0
        %642 = vmatpush.bf16.xpose.msra.mxu0 0
        %643 = vmatpush.bf16.xpose.msra.mxu0 0
        %644 = vmatpush.bf16.xpose.msra.mxu0 0
        %645 = vmatpush.bf16.xpose.msra.mxu0 %v636
        %646 = vmatmul.bf16.gmra.mxu0 %v633
        %v647 = vpop.f32.mrf.mxu0
        %v648 = vadd.f32 0.0, %v647
        %v649 = vpop.f32.mrf.mxu0
        %650 = vdwg.mxu0
        %v651 = vsel %vm505, %v648, -inf
        %652 = vmax.xlane.f32.xlu0 %v651
        %v653 = vpop.xlane.xlu0 %652
        %v654 = vsub.f32 %v648, %v653
        %v655 = vmul.f32 %v654, 1.442695
        %v656 = vpow.pop %v655
        %v657 = vsel %vm505, %v656, 0.0
        %658 = vadd.xlane.f32.xlu0 %v657
        %v659 = vpop.xlane.xlu0 %658
        %v660 = vrcp.pop %v659
        %v661 = vmul.f32 %v656, %v660
        %v662 = vpack.c.bf16 %v661, %v661
        %663 = vrot.lane.b32.xlu0 %v599, 112
        %v664 = vpop.permute.xlu0 %663
        %v666 = vsel %vm505, %v662, 0
        %v669 = vsel %vm540, %v664, 0
        %671 = vmatpush.bf16.msra.mxu0 0
        %672 = vmatpush.bf16.msra.mxu0 0
        %673 = vmatpush.bf16.msra.mxu0 0
        %674 = vmatpush.bf16.msra.mxu0 0
        %675 = vmatpush.bf16.msra.mxu0 0
        %676 = vmatpush.bf16.msra.mxu0 0
        %677 = vmatpush.bf16.msra.mxu0 0
        %678 = vmatpush.bf16.msra.mxu0 %v669
        %679 = vmatmul.bf16.gmra.mxu0 %v666
        %v680 = vpop.f32.mrf.mxu0
        %v681 = vadd.f32 0.0, %v680
        %v682 = vpop.f32.mrf.mxu0
        %683 = vdwg.mxu0
        %v684 = vpack.c.bf16 %v681, %v681
        %686 = vrot.lane.b32.xlu0 %v684, 16
        %v687 = vpop.permute.xlu0 %686
        %vm689 = vcmask 191616
        %690 = vst.msk [vmem:[#allocation2] sm:$0xf] %vm689, %v687
        %691 = vrot.lane.b32.xlu0 %v561, 104
        %v692 = vpop.permute.xlu0 %691
        %693 = vrot.lane.b32.xlu0 %v504, 104
        %v694 = vpop.permute.xlu0 %693
        %v696 = vsel %vm505, %v692, 0
        %v699 = vsel %vm505, %v694, 0
        %701 = vmatpush.bf16.xpose.msra.mxu0 0
        %702 = vmatpush.bf16.xpose.msra.mxu0 0
        %703 = vmatpush.bf16.xpose.msra.mxu0 0
        %704 = vmatpush.bf16.xpose.msra.mxu0 0
        %705 = vmatpush.bf16.xpose.msra.mxu0 0
        %706 = vmatpush.bf16.xpose.msra.mxu0 0
        %707 = vmatpush.bf16.xpose.msra.mxu0 0
        %708 = vmatpush.bf16.xpose.msra.mxu0 %v699
        %709 = vmatmul.bf16.gmra.mxu0 %v696
        %v710 = vpop.f32.mrf.mxu0
        %v711 = vadd.f32 0.0, %v710
        %v712 = vpop.f32.mrf.mxu0
        %713 = vdwg.mxu0
        %v714 = vsel %vm505, %v711, -inf
        %715 = vmax.xlane.f32.xlu0 %v714
        %v716 = vpop.xlane.xlu0 %715
        %v717 = vsub.f32 %v711, %v716
        %v718 = vmul.f32 %v717, 1.442695
        %v719 = vpow.pop %v718
        %v720 = vsel %vm505, %v719, 0.0
        %721 = vadd.xlane.f32.xlu0 %v720
        %v722 = vpop.xlane.xlu0 %721
        %v723 = vrcp.pop %v722
        %v724 = vmul.f32 %v719, %v723
        %v725 = vpack.c.bf16 %v724, %v724
        %726 = vrot.lane.b32.xlu0 %v599, 104
        %v727 = vpop.permute.xlu0 %726
        %v729 = vsel %vm505, %v725, 0
        %v732 = vsel %vm540, %v727, 0
        %734 = vmatpush.bf16.msra.mxu0 0
        %735 = vmatpush.bf16.msra.mxu0 0
        %736 = vmatpush.bf16.msra.mxu0 0
        %737 = vmatpush.bf16.msra.mxu0 0
        %738 = vmatpush.bf16.msra.mxu0 0
        %739 = vmatpush.bf16.msra.mxu0 0
        %740 = vmatpush.bf16.msra.mxu0 0
        %741 = vmatpush.bf16.msra.mxu0 %v732
        %742 = vmatmul.bf16.gmra.mxu0 %v729
        %v743 = vpop.f32.mrf.mxu0
        %v744 = vadd.f32 0.0, %v743
        %v745 = vpop.f32.mrf.mxu0
        %746 = vdwg.mxu0
        %v747 = vpack.c.bf16 %v744, %v744
        %749 = vrot.lane.b32.xlu0 %v747, 24
        %v750 = vpop.permute.xlu0 %749
        %vm752 = vcmask 257216
        %753 = vst.msk [vmem:[#allocation2] sm:$0xf] %vm752, %v750
        %v754 = vld [vmem:[#allocation2] sm:$0xf]
        %v755 = vld [vmem:[#allocation9] sm:$0xf]
        %v756 = vld [vmem:[#allocation9 + $0x4] sm:$0xf]
        %v757 = vld [vmem:[#allocation9 + $0x8] sm:$0xf]
        %v758 = vld [vmem:[#allocation9 + $0xc] sm:$0xf]
        %v759 = vld [vmem:[#allocation9 + $0x10] sm:$0xf]
        %v760 = vld [vmem:[#allocation9 + $0x14] sm:$0xf]
        %v761 = vld [vmem:[#allocation9 + $0x18] sm:$0xf]
        %v762 = vld [vmem:[#allocation9 + $0x1c] sm:$0xf]
        %v763 = vld [vmem:[#allocation9 + $0x20] sm:$0xf]
        %v764 = vld [vmem:[#allocation9 + $0x24] sm:$0xf]
        %v765 = vld [vmem:[#allocation9 + $0x28] sm:$0xf]
        %v766 = vld [vmem:[#allocation9 + $0x2c] sm:$0xf]
        %v767 = vld [vmem:[#allocation9 + $0x30] sm:$0xf]
        %v768 = vld [vmem:[#allocation9 + $0x34] sm:$0xf]
        %v769 = vld [vmem:[#allocation9 + $0x38] sm:$0xf]
        %v770 = vld [vmem:[#allocation9 + $0x3c] sm:$0xf]
        %v771 = vld [vmem:[%s4] sm:$0x1]
        %v773 = vperm.slane %v771, 0
        %v791 = vunpack.c.l.b16 %v755
        %v792 = vunpack.c.l.b16 %v756
        %v793 = vunpack.c.l.b16 %v757
        %v794 = vunpack.c.l.b16 %v758
        %v795 = vunpack.c.l.b16 %v759
        %v796 = vunpack.c.l.b16 %v760
        %v797 = vunpack.c.l.b16 %v761
        %v798 = vunpack.c.l.b16 %v762
        %v799 = vunpack.c.l.b16 %v763
        %v800 = vunpack.c.l.b16 %v764
        %v801 = vunpack.c.l.b16 %v765
        %v802 = vunpack.c.l.b16 %v766
        %v803 = vunpack.c.l.b16 %v767
        %v804 = vunpack.c.l.b16 %v768
        %v805 = vunpack.c.l.b16 %v769
        %v806 = vunpack.c.l.b16 %v770
        %v807 = vpack.c.b16 %v792, %v791
        %v808 = vpack.c.b16 %v794, %v793
        %v809 = vpack.c.b16 %v796, %v795
        %v810 = vpack.c.b16 %v798, %v797
        %v811 = vpack.c.b16 %v800, %v799
        %v812 = vpack.c.b16 %v802, %v801
        %v813 = vpack.c.b16 %v804, %v803
        %v814 = vpack.c.b16 %v806, %v805
        %823 = vmatpush.bf16.msra.mxu0 %v814
        %824 = vmatpush.bf16.msra.mxu0 %v813
        %825 = vmatpush.bf16.msra.mxu0 %v812
        %826 = vmatpush.bf16.msra.mxu0 %v811
        %827 = vmatpush.bf16.msra.mxu0 %v810
        %828 = vmatpush.bf16.msra.mxu0 %v809
        %829 = vmatpush.bf16.msra.mxu0 %v808
        %830 = vmatpush.bf16.msra.mxu0 %v807
        %831 = vmatmul.bf16.gmra.mxu0 %v754
        %v832 = vpop.f32.mrf.mxu0
        %v833 = vadd.f32 %v773, %v832
        %v834 = vpop.f32.mrf.mxu0
        %835 = vdwg.mxu0
        %836 = vst [vmem:[%s289] sm:$0xff] %v833
        %s837 = sand.u32 %s142, 1
        %s838 = scalar_lea.sflag [#allocation5], %s837
        %s839 = sand.u32 %s142, 1
        %s840 = smul.addr %s839, 8
        %s841 = scalar_lea.vmem [#allocation11], %s840
        // Predicated region
        $region57: #{tpu_custom_call.1} parent=39 // pred_check
          %p842 = pneg %p152
        $region58: #{tpu_custom_call.1} parent=39 // pred_check_branch
          %844 = sbr.rel (%p842) target = $region60
        $region59: #{tpu_custom_call.1} parent=39 // pred_region
          %846 = vsyncadd %s838, 0
          %s847 = smul.addr %s24, 8
          %s848 = scalar_lea.hbm %s5, %s847
          %s850 = sshll.u32 %s841, 4
          %s851 = int_to_ptr.vmem [resolvable:$true] %s850
          %s852 = sshll.u32 %s848, 4
          %s853 = int_to_ptr.hbm [resolvable:$true] %s852
          %855 = dma.vmem_to_hbm [thread:$0]  %s851, 128, %s853, %s838
        $region60: #{tpu_custom_call.1} parent=39 // pred_fallthru
          _
      $region40: #{tpu_custom_call.1} parent=5 // pred_fallthru
        _
      %p856 = scmp.le.s32.totalorder 2, %s19
      // Predicated region
      $region61: #{tpu_custom_call.1} parent=5 // pred_check
        %p857 = pneg %p856
      $region62: #{tpu_custom_call.1} parent=5 // pred_check_branch
        %859 = sbr.rel (%p857) target = $region64
      $region63: #{tpu_custom_call.1} parent=5 // pred_region
        %s860 = ssub.s32 %s19, 2
        // Predicated region
        $region65: #{tpu_custom_call.1} parent=63 // pred_check
          %p861 = pneg %p158
        $region66: #{tpu_custom_call.1} parent=63 // pred_check_branch
          %863 = sbr.rel (%p861) target = $region68
        $region67: #{tpu_custom_call.1} parent=63 // pred_region
          %s864 = sand.u32 %s143, 1
          %s865 = scalar_lea.sflag [#allocation5], %s864
          %s866 = sand.u32 %s143, 1
          %s867 = smul.addr %s866, 8
          %s868 = scalar_lea.vmem [#allocation11], %s867
          %870 = dma.done %s865, 128
        $region68: #{tpu_custom_call.1} parent=63 // pred_fallthru
          _
      $region64: #{tpu_custom_call.1} parent=5 // pred_fallthru
        _
    $region6: #{tpu_custom_call.1} parent=1 // loop_footer
      %s23 = sadd.s32 1, %s19
    $region7: #{tpu_custom_call.1} parent=1 // loop_footer_branch
      %18 = sbr.rel target = $region3
    $region8: #{tpu_custom_call.1} parent=1 // loop_exit
      _
    %871 = vsyncpa [#allocation4], 1
    %s872 = scalar_lea.sflag [#allocation4], 1
    %873 = vsyncpa %s872, 1
    %874 = vsyncpa [#allocation7], 1
    %875 = vsyncpa [#allocation10], 1
    %876 = vsyncpa [#allocation5], 1
    %s877 = scalar_lea.sflag [#allocation5], 1
    %878 = vsyncpa %s877, 1

</llo_original>
